<compile_context>
chip_gen: v5e
topology: v5e:2x2
jax: 0.10.0
libtpu: 0.0.40
codegen_flags: <defaults>
</compile_context>

<pallas_src>
import functools

import numpy as np
import jax
import jax.numpy as jnp
from jax import lax
from jax.experimental import pallas as pl
from jax.experimental.pallas import tpu as pltpu


PSP_SIZES = (1, 3, 6, 8)


def _adaptive_pool_matrix(H, W, sizes):
    """(H*W, S) matrix so feat_flat @ P == concat of AdaptiveAvgPool2d(s) outputs."""
    cols = []
    for s in sizes:
        h_start = [int(np.floor(i * H / s)) for i in range(s)]
        h_end = [int(np.ceil((i + 1) * H / s)) for i in range(s)]
        w_start = [int(np.floor(j * W / s)) for j in range(s)]
        w_end = [int(np.ceil((j + 1) * W / s)) for j in range(s)]
        for i in range(s):
            for j in range(s):
                m = np.zeros((H, W), dtype=np.float32)
                nh = h_end[i] - h_start[i]
                nw = w_end[j] - w_start[j]
                m[h_start[i]:h_end[i], w_start[j]:w_end[j]] = 1.0 / (nh * nw)
                cols.append(m.reshape(-1))
    return np.stack(cols, axis=1)  # (H*W, S)


@functools.lru_cache(maxsize=None)
def _padded_pool_matrix(H, W, sizes, hw_pad):
    """Pooling matrix zero-padded to (hw_pad, S_pad); returns (P, S, S_pad)."""
    P = _adaptive_pool_matrix(H, W, sizes)
    S = P.shape[1]                                   # 110 for (1, 3, 6, 8)
    S_pad = max(128, ((S + 127) // 128) * 128)
    P_pad = np.zeros((hw_pad, S_pad), dtype=np.float32)
    P_pad[:H * W, :S] = P                            # padded rows/cols stay zero
    return P_pad, S, S_pad


def _choose_tiling(hw, max_tile):
    """Return (hw_pad, tile): tile is a multiple of 128 and divides hw_pad >= hw."""
    max_tile = max(128, (max_tile // 128) * 128)
    hw_pad128 = -(-hw // 128) * 128
    if hw_pad128 <= max_tile:
        return hw_pad128, hw_pad128                  # single lane-padded tile
    best_t, best_pad = None, None
    for m in range(max_tile // 128, 0, -1):          # largest tile first ...
        t = 128 * m
        padded = -(-hw // t) * t
        if best_pad is None or padded < best_pad:    # ... keep the largest tile
            best_t, best_pad = t, padded             #     with minimal padding
    return best_pad, best_t


def _psp_key_kernel(x_ref, wk_ref, shift_ref, p_ref, key_ref, *,
                    n_inner, t_hw, p_resident):
    """Accumulate a partial key = ReLU((scale*W)@x + shift) @ P over HW tiles."""
    @pl.when(pl.program_id(2) == 0)
    def _():
        key_ref[...] = jnp.zeros_like(key_ref)

    # Fused 1x1 conv + folded eval-BN + ReLU (f32 accumulation on the MXU).
    feat = jnp.dot(wk_ref[...], x_ref[0], preferred_element_type=jnp.float32)
    feat = jnp.maximum(feat + shift_ref[...], 0.0)                  # (C, t_hw) f32

    if p_resident:
        # Whole P lives in VMEM (fetched once); slice this tile's rows.
        tile = pl.program_id(0) * n_inner + pl.program_id(2)
        start = pl.multiple_of(tile * t_hw, 128)
        p_tile = p_ref[pl.ds(start, t_hw), :]
    else:
        p_tile = p_ref[...]
    key_ref[0, 0] = key_ref[0, 0] + jnp.dot(
        feat.astype(p_tile.dtype), p_tile, preferred_element_type=jnp.float32)


def _attention_kernel(x_ref, wk_ref, shift_ref, key_s_ref, key_aug_ref, o_ref,
                      *, compute_dtype, approx_recip):
    """Per HW tile: recompute feat, attend over the resident pooled key."""
    feat = jnp.dot(wk_ref[...], x_ref[0], preferred_element_type=jnp.float32)
    feat = jnp.maximum(feat + shift_ref[...], 0.0)                  # (C, t_hw) f32
    feat_c = feat.astype(compute_dtype)

    # Logits (t_hw, S_pad): contract the channel dim directly (query = feat^T).
    # C^-0.5 is pre-folded into key_s by the wrapper.  Padded pooled bins have
    # key columns == 0 -> their logits are exactly 0; no additive mask needed
    # (softmax is shift-invariant; the valid-bin row below masks the denom).
    sim = lax.dot_general(feat_c, key_s_ref[0], (((0,), (0,)), ((), ())),
                          preferred_element_type=jnp.float32)

    # Softmax kept in f32 (v5e has no bf16 VPU/EUP); normalization deferred.
    m = jnp.max(sim, axis=-1, keepdims=True)
    e = jnp.exp(sim - m).astype(compute_dtype)

    # One (C+1, S_pad) x (S_pad, t_hw) matmul: rows 0..C-1 = unnormalized
    # context^T, row C (the 0/1 valid-bin mask) = softmax denominator.
    num_den = lax.dot_general(key_aug_ref[0], e, (((1,), (1,)), ((), ())),
                              preferred_element_type=jnp.float32)
    num = num_den[:-1]                                              # (C, t_hw)
    den = num_den[-1:]                                              # (1, t_hw)
    o_ref[0] = (num * pl.reciprocal(den, approx=approx_recip)).astype(o_ref.dtype)


def self_attention_block(x_nchw, conv_w, conv_b, bn_gamma, bn_beta, bn_mean,
                         bn_var, psp_sizes=PSP_SIZES, eps=1e-5,
                         compute_dtype=jnp.bfloat16, out_dtype=None,
                         max_hw_tile=2048):
    B, C, H, W = x_nchw.shape
    HW = H * W
    out_dtype = x_nchw.dtype if out_dtype is None else out_dtype

    hw_pad, t_hw = _choose_tiling(HW, max_hw_tile)
    n_t = hw_pad // t_hw
    # Split kernel 1's HW reduction in two when possible so both v7x TensorCores
    # get work even at B == 1; the two partial keys are summed in the wrapper.
    n_split = 2 if (n_t % 2 == 0 and n_t >= 2) else 1
    n_inner = n_t // n_split

    P_np, S, S_pad = _padded_pool_matrix(H, W, tuple(psp_sizes), hw_pad)

    c_size = np.dtype(compute_dtype).itemsize
    o_size = np.dtype(out_dtype).itemsize
    approx_recip = np.dtype(compute_dtype) != np.dtype(np.float32)

    x = x_nchw.reshape(B, C, HW).astype(compute_dtype)
    if hw_pad != HW:
        # Padded pixels have zero P rows (key unaffected); their outputs are
        # computed but sliced off below.  Keeps every store lane-dense.
        x = jnp.pad(x, ((0, 0), (0, 0), (0, hw_pad - HW)))

    # Fold conv bias + eval-mode BatchNorm fully into the conv weight / a shift:
    #   feat = ReLU((scale*W) @ x + shift),   scale = gamma / sqrt(var + eps),
    #   shift = beta + scale * (bias - mean).     (scale*(W@x) == (scale*W)@x)
    scale = (bn_gamma / jnp.sqrt(bn_var + eps)).astype(jnp.float32)
    shift = (bn_beta + scale * (conv_b - bn_mean)).astype(jnp.float32).reshape(C, 1)
    wk = (scale.reshape(C, 1) * conv_w.reshape(C, C).astype(jnp.float32)
          ).astype(compute_dtype)

    P = jnp.asarray(P_np, dtype=compute_dtype)       # (hw_pad, S_pad)

    # Keep the whole pooling matrix resident in VMEM (constant index_map ->
    # fetched once) unless its double-buffered footprint is too large.
    p_resident = 2 * hw_pad * S_pad * c_size <= (16 << 20)

    # Explicit VMEM limit: double-buffered footprint + headroom, clamped so it
    # also fits v7x's 64 MiB physical VMEM.  (v5e's scoped default is 16 MiB,
    # so being explicit is what enables the larger HW tiles there.)
    k1_bytes = 2 * (C * t_hw * c_size + C * S_pad * 4 + C * C * c_size + C * 4)
    k1_bytes += 2 * (hw_pad if p_resident else t_hw) * S_pad * c_size
    k2_bytes = 2 * (C * t_hw * c_size + C * t_hw * o_size + C * C * c_size
                    + C * 4 + (2 * C + 1) * S_pad * c_size)
    vmem_limit = int(min(max(32 << 20,
                             int(1.3 * max(k1_bytes, k2_bytes)) + (4 << 20)),
                         56 << 20))

    # ---- Kernel 1: pooled key accumulation (reduction over HW tiles) ----
    key_parts = pl.pallas_call(
        functools.partial(_psp_key_kernel, n_inner=n_inner, t_hw=t_hw,
                          p_resident=p_resident),
        out_shape=jax.ShapeDtypeStruct((n_split, B, C, S_pad), jnp.float32),
        grid_spec=pltpu.PrefetchScalarGridSpec(
            num_scalar_prefetch=0,
            grid=(n_split, B, n_inner),
            in_specs=[
                pl.BlockSpec((1, C, t_hw),
                             lambda h, b, t: (b, 0, h * n_inner + t)),   # x tile
                pl.BlockSpec((C, C), lambda h, b, t: (0, 0)),            # folded conv W
                pl.BlockSpec((C, 1), lambda h, b, t: (0, 0)),            # folded shift
                (pl.BlockSpec((hw_pad, S_pad), lambda h, b, t: (0, 0))   # resident P
                 if p_resident else
                 pl.BlockSpec((t_hw, S_pad),
                              lambda h, b, t: (h * n_inner + t, 0))),    # streamed P
            ],
            out_specs=pl.BlockSpec((1, 1, C, S_pad),
                                   lambda h, b, t: (h, b, 0, 0)),
        ),
        compiler_params=pltpu.CompilerParams(
            dimension_semantics=("parallel", "parallel", "arbitrary"),
            vmem_limit_bytes=vmem_limit),
    )(x, wk, shift, P)

    # Tiny per-batch finalize in the wrapper (hoisted out of the per-tile body):
    # sum the megacore partials, pre-scale by C^-0.5, cast to the MXU dtype,
    # and append the 0/1 valid-bin row used for the merged denominator.
    key = key_parts.sum(axis=0)                                   # (B, C, S_pad) f32
    inv_sqrt_c = float(C) ** -0.5
    key_s = (key * inv_sqrt_c).astype(compute_dtype)              # (B, C, S_pad)
    valid = jnp.concatenate([jnp.ones((S,), jnp.float32),
                             jnp.zeros((S_pad - S,), jnp.float32)])
    key_aug = jnp.concatenate(
        [key, jnp.broadcast_to(valid, (B, 1, S_pad))], axis=1
    ).astype(compute_dtype)                                       # (B, C+1, S_pad)

    # ---- Kernel 2: attention per HW tile against the resident pooled key ----
    out = pl.pallas_call(
        functools.partial(_attention_kernel, compute_dtype=compute_dtype,
                          approx_recip=approx_recip),
        out_shape=jax.ShapeDtypeStruct((B, C, hw_pad), out_dtype),
        grid_spec=pltpu.PrefetchScalarGridSpec(
            num_scalar_prefetch=0,
            grid=(B, n_t),
            in_specs=[
                pl.BlockSpec((1, C, t_hw), lambda b, t: (b, 0, t)),      # x tile
                pl.BlockSpec((C, C), lambda b, t: (0, 0)),               # folded conv W
                pl.BlockSpec((C, 1), lambda b, t: (0, 0)),               # folded shift
                pl.BlockSpec((1, C, S_pad), lambda b, t: (b, 0, 0)),     # key * C^-0.5
                pl.BlockSpec((1, C + 1, S_pad), lambda b, t: (b, 0, 0)), # [key; valid]
            ],
            out_specs=pl.BlockSpec((1, C, t_hw), lambda b, t: (b, 0, t)),
        ),
        compiler_params=pltpu.CompilerParams(
            dimension_semantics=("parallel", "parallel"),   # both axes independent
            vmem_limit_bytes=vmem_limit),
    )(x, wk, shift, key_s, key_aug)

    if hw_pad != HW:
        out = out[:, :, :HW]
    return out.reshape(B, C, H, W)


def reference(x, conv_w, conv_b, gamma, beta, mean, var,
              psp_sizes=PSP_SIZES, eps=1e-5):
    """Pure-JAX f32 reference mirroring the PyTorch forward (eval-mode BN)."""
    B, C, H, W = x.shape
    xf = x.reshape(B, C, H * W)
    wk = conv_w.reshape(C, C)
    conv = jnp.einsum('oc,bcl->bol', wk, xf) + conv_b[None, :, None]
    bn = (gamma[None, :, None] * (conv - mean[None, :, None])
          / jnp.sqrt(var[None, :, None] + eps) + beta[None, :, None])
    feat = jnp.maximum(bn, 0.0)
    P = jnp.asarray(_adaptive_pool_matrix(H, W, psp_sizes))
    key = jnp.einsum('bcl,ls->bcs', feat, P)
    query = jnp.transpose(feat, (0, 2, 1))
    sim = jnp.einsum('blc,bcs->bls', query, key) * (C ** -0.5)
    sim = jax.nn.softmax(sim, axis=-1)
    ctx = jnp.einsum('bls,bcs->blc', sim, key)
    return jnp.transpose(ctx, (0, 2, 1)).reshape(B, C, H, W)


if __name__ == "__main__":
    B, C, H, W = 2, 4, 16, 16

    key0 = jax.random.PRNGKey(0)
    k_x, k_w, k_b, k_g, k_bt, k_m, k_v = jax.random.split(key0, 7)

    x = jax.random.normal(k_x, (B, C, H, W), dtype=jnp.float32)
    conv_w = jax.random.normal(k_w, (C, C, 1, 1), dtype=jnp.float32) * 0.3
    conv_b = jax.random.normal(k_b, (C,), dtype=jnp.float32) * 0.1
    bn_gamma = 1.0 + 0.1 * jax.random.normal(k_g, (C,), dtype=jnp.float32)
    bn_beta = 0.1 * jax.random.normal(k_bt, (C,), dtype=jnp.float32)
    bn_mean = 0.1 * jax.random.normal(k_m, (C,), dtype=jnp.float32)
    bn_var = 1.0 + 0.1 * jnp.abs(jax.random.normal(k_v, (C,), dtype=jnp.float32))

    ref = reference(x, conv_w, conv_b, bn_gamma, bn_beta, bn_mean, bn_var)

    # f32 path: validates exact forward semantics (exact reciprocal, f32 MXU).
    out_f32 = jax.block_until_ready(
        self_attention_block(x, conv_w, conv_b, bn_gamma, bn_beta, bn_mean,
                             bn_var, compute_dtype=jnp.float32))
    assert out_f32.shape == (B, C, H, W)
    np.testing.assert_allclose(np.asarray(out_f32), np.asarray(ref),
                               rtol=1e-4, atol=1e-4)

    # Default perf config: bf16 MXU operands, bf16 output, approx reciprocal.
    out_bf16 = jax.block_until_ready(
        self_attention_block(x, conv_w, conv_b, bn_gamma, bn_beta, bn_mean,
                             bn_var, compute_dtype=jnp.bfloat16,
                             out_dtype=jnp.bfloat16))
    np.testing.assert_allclose(np.asarray(out_bf16.astype(jnp.float32)),
                               np.asarray(ref), rtol=5e-2, atol=5e-2)

    # Non-multiple-of-128 spatial size: exercises the HW padding/slicing path.
    Hp, Wp = 15, 13
    xp = jax.random.normal(k_x, (1, C, Hp, Wp), dtype=jnp.float32)
    refp = reference(xp, conv_w, conv_b, bn_gamma, bn_beta, bn_mean, bn_var)
    outp = jax.block_until_ready(
        self_attention_block(xp, conv_w, conv_b, bn_gamma, bn_beta, bn_mean,
                             bn_var, compute_dtype=jnp.float32))
    np.testing.assert_allclose(np.asarray(outp), np.asarray(refp),
                               rtol=1e-4, atol=1e-4)

    print("KERNEL_OK")
</pallas_src>

<mosaic_0001>
module attributes {stable_mosaic.version = 11 : i64} {
  func.func @_psp_key_kernel(%arg0: i32, %arg1: i32, %arg2: i32, %arg3: memref<1x4x256xf32, #tpu.memory_space<vmem>>, %arg4: memref<4x4xf32, #tpu.memory_space<vmem>>, %arg5: memref<4x1xf32, #tpu.memory_space<vmem>>, %arg6: memref<256x128xf32, #tpu.memory_space<vmem>>, %arg7: memref<1x1x4x128xf32, #tpu.memory_space<vmem>>) attributes {dimension_semantics = [#tpu.dimension_semantics<parallel>, #tpu.dimension_semantics<parallel>, #tpu.dimension_semantics<arbitrary>], iteration_bounds = array<i64: 1, 2, 1>, scalar_prefetch = 0 : i64, scratch_operands = 0 : i64, tpu.core_type = #tpu.core_type<tc>, window_params = [{transform_indices = @transform_0, window_bounds = array<i64: 1, 4, 256>}, {pipeline_mode = #tpu.pipeline_mode<synchronous>, transform_indices = @transform_1, window_bounds = array<i64: 4, 4>}, {pipeline_mode = #tpu.pipeline_mode<synchronous>, transform_indices = @transform_2, window_bounds = array<i64: 4, 1>}, {pipeline_mode = #tpu.pipeline_mode<synchronous>, transform_indices = @transform_3, window_bounds = array<i64: 256, 128>}, {transform_indices = @transform_4, window_bounds = array<i64: 1, 1, 4, 128>}]} {
    %c0_i32 = arith.constant 0 : i32
    %0 = arith.cmpi eq, %arg2, %c0_i32 : i32
    %1 = arith.extui %0 : i1 to i32
    %c0_i32_0 = arith.constant 0 : i32
    %2 = arith.cmpi ne, %1, %c0_i32_0 : i32
    scf.if %2 {
      %cst_18 = arith.constant 0.000000e+00 : f32
      %25 = vector.broadcast %cst_18 : f32 to vector<1x1x4x128xf32>
      %c0_19 = arith.constant 0 : index
      %c0_20 = arith.constant 0 : index
      %c0_21 = arith.constant 0 : index
      %c0_22 = arith.constant 0 : index
      %26 = vector.load %arg7[%c0_19, %c0_20, %c0_21, %c0_22] : memref<1x1x4x128xf32, #tpu.memory_space<vmem>>, vector<1x1x4x128xf32>
      tpu.vector_store %arg7[%c0_19, %c0_20, %c0_21, %c0_22], %25 {strides = array<i32>} : memref<1x1x4x128xf32, #tpu.memory_space<vmem>>, vector<1x1x4x128xf32>,
    } else {
    }
    %c0 = arith.constant 0 : index
    %c0_1 = arith.constant 0 : index
    %3 = vector.load %arg4[%c0, %c0_1] : memref<4x4xf32, #tpu.memory_space<vmem>>, vector<4x4xf32>
    %c0_2 = arith.constant 0 : index
    %c0_3 = arith.constant 0 : index
    %c0_4 = arith.constant 0 : index
    %4 = vector.load %arg3[%c0_2, %c0_3, %c0_4] : memref<1x4x256xf32, #tpu.memory_space<vmem>>, vector<1x4x256xf32>
    %5 = vector.shape_cast %4 : vector<1x4x256xf32> to vector<4x256xf32>
    %cst = arith.constant dense<0.000000e+00> : vector<4x256xf32>
    %6 = tpu.matmul %3, %5, %cst {dimension_numbers = #tpu.dot_dimension_numbers<[1], [0], [0], [1], [0, 0, 1, 1], [], []>} : vector<4x4xf32>, vector<4x256xf32>, vector<4x256xf32> -> vector<4x256xf32>
    %c0_5 = arith.constant 0 : index
    %c0_6 = arith.constant 0 : index
    %7 = vector.load %arg5[%c0_5, %c0_6] : memref<4x1xf32, #tpu.memory_space<vmem>>, vector<4x1xf32>
    %8 = vector.broadcast %7 : vector<4x1xf32> to vector<4x256xf32>
    %9 = arith.addf %6, %8 : vector<4x256xf32>
    %cst_7 = arith.constant 0.000000e+00 : f32
    %10 = vector.broadcast %cst_7 : f32 to vector<4x256xf32>
    %11 = arith.maximumf %9, %10 : vector<4x256xf32>
    %c1_i32 = arith.constant 1 : i32
    %12 = arith.muli %arg0, %c1_i32 : i32
    %13 = arith.addi %12, %arg2 : i32
    %c256_i32 = arith.constant 256 : i32
    %14 = arith.muli %13, %c256_i32 : i32
    %15 = tpu.assume_multiple %14, 128 : i32
    %16 = arith.index_cast %15 : i32 to index
    %c0_8 = arith.constant 0 : index
    %17 = vector.load %arg6[%16, %c0_8] : memref<256x128xf32, #tpu.memory_space<vmem>>, vector<256x128xf32>
    %c0_9 = arith.constant 0 : index
    %c0_10 = arith.constant 0 : index
    %c0_11 = arith.constant 0 : index
    %c0_12 = arith.constant 0 : index
    %18 = vector.load %arg7[%c0_9, %c0_10, %c0_11, %c0_12] : memref<1x1x4x128xf32, #tpu.memory_space<vmem>>, vector<1x1x4x128xf32>
    %19 = vector.shape_cast %18 : vector<1x1x4x128xf32> to vector<4x128xf32>
    %cst_13 = arith.constant dense<0.000000e+00> : vector<4x128xf32>
    %20 = tpu.matmul %11, %17, %cst_13 {dimension_numbers = #tpu.dot_dimension_numbers<[1], [0], [0], [1], [0, 0, 1, 1], [], []>} : vector<4x256xf32>, vector<256x128xf32>, vector<4x128xf32> -> vector<4x128xf32>
    %21 = arith.addf %19, %20 : vector<4x128xf32>
    %c0_14 = arith.constant 0 : index
    %c0_15 = arith.constant 0 : index
    %c0_16 = arith.constant 0 : index
    %c0_17 = arith.constant 0 : index
    %22 = vector.load %arg7[%c0_14, %c0_15, %c0_16, %c0_17] : memref<1x1x4x128xf32, #tpu.memory_space<vmem>>, vector<1x1x4x128xf32>
    %23 = vector.shape_cast %22 : vector<1x1x4x128xf32> to vector<4x128xf32>
    %24 = vector.shape_cast %21 : vector<4x128xf32> to vector<1x1x4x128xf32>
    tpu.vector_store %arg7[%c0_14, %c0_15, %c0_16, %c0_17], %24 {strides = array<i32>} : memref<1x1x4x128xf32, #tpu.memory_space<vmem>>, vector<1x1x4x128xf32>,
    return
  }
  func.func @transform_0(%arg0: i32, %arg1: i32, %arg2: i32) -> (i32, i32, i32) {
    %c1_i32 = arith.constant 1 : i32
    %0 = arith.muli %arg0, %c1_i32 : i32
    %1 = arith.addi %0, %arg2 : i32
    %c0_i32 = arith.constant 0 : i32
    %c0_i32_0 = arith.constant 0 : i32
    return %arg1, %c0_i32, %1 : i32, i32, i32
  }
  func.func @transform_1(%arg0: i32, %arg1: i32, %arg2: i32) -> (i32, i32) {
    %c0_i32 = arith.constant 0 : i32
    %c0_i32_0 = arith.constant 0 : i32
    %c0_i32_1 = arith.constant 0 : i32
    return %c0_i32, %c0_i32_0 : i32, i32
  }
  func.func @transform_2(%arg0: i32, %arg1: i32, %arg2: i32) -> (i32, i32) {
    %c0_i32 = arith.constant 0 : i32
    %c0_i32_0 = arith.constant 0 : i32
    %c0_i32_1 = arith.constant 0 : i32
    return %c0_i32, %c0_i32_0 : i32, i32
  }
  func.func @transform_3(%arg0: i32, %arg1: i32, %arg2: i32) -> (i32, i32) {
    %c0_i32 = arith.constant 0 : i32
    %c0_i32_0 = arith.constant 0 : i32
    %c0_i32_1 = arith.constant 0 : i32
    return %c0_i32, %c0_i32_0 : i32, i32
  }
  func.func @transform_4(%arg0: i32, %arg1: i32, %arg2: i32) -> (i32, i32, i32, i32) {
    %c0_i32 = arith.constant 0 : i32
    %c0_i32_0 = arith.constant 0 : i32
    %c0_i32_1 = arith.constant 0 : i32
    return %arg0, %arg1, %c0_i32, %c0_i32_0 : i32, i32, i32, i32
  }
}

</mosaic_0001>

<llo_original>
// kernel: tpu_custom_call.1
$region0: #{tpu_custom_call.1}
  #allocation0 [shape = 'u32[]', space=smem, size = 0x4, offset = 0x4, fixed_abs, tag = 'smem constant byte address 0x4 - core index']
  #allocation1 [shape = 'u32[72,128]{1,0:T(1,128)}', space=vmem, size = 0x9000, scoped, tag = 'internal scratch']
  %s0 = inlined_call_operand.hbm [shape: f32[2,4,256], index: 0, kind: input, shape index: {}]
  %s1 = inlined_call_operand.vmem [shape: f32[4,4], index: 1, kind: input, shape index: {}]
  %s2 = inlined_call_operand.vmem [shape: f32[4,1], index: 2, kind: input, shape index: {}]
  %s3 = inlined_call_operand.hbm [shape: f32[256,128], index: 3, kind: input, shape index: {}]
  %s4 = inlined_call_operand.hbm [shape: f32[1,2,4,128], index: 4, kind: output, shape index: {}]
  %s5 = sld [smem:[#allocation0]]
  $region61: #{tpu_custom_call.1} parent=0
    _
  %s7 = ssub.s32 1, %s5
  %s8 = scalar_select 0, %s7, %s5
  $region1: #{tpu_custom_call.1} parent=0
    #allocation2 [shape = 'u8[8192]{0}', space=vmem, size = 0x2000, scoped, tag = 'input window, operand 0']
    #allocation3 [shape = 's32[2]{0}', space=sflag, size = 0x8, scoped, tag = 'scoped memory for tpu_custom_call.1']
    #allocation4 [shape = 's32[2]{0}', space=sflag, size = 0x8, scoped, tag = 'scoped memory for tpu_custom_call.1']
    #allocation5 [shape = 'u8[131072]{0}', space=vmem, size = 0x20000, scoped, tag = 'input window, operand 3, single buffered']
    #allocation6 [shape = 's32[1]{0}', space=sflag, size = 0x4, scoped, tag = 'scoped memory for tpu_custom_call.1']
    #allocation7 [shape = 'u8[4096]{0}', space=vmem, size = 0x1000, scoped, tag = 'output window, operand 0']
    %9 = vsyncpa [#allocation3], 0
    %s10 = scalar_lea.sflag [#allocation3], 1
    %11 = vsyncpa %s10, 0
    %12 = vsyncpa [#allocation6], 0
    %13 = vsyncpa [#allocation4], 0
    %s14 = scalar_lea.sflag [#allocation4], 1
    %15 = vsyncpa %s14, 0
    loop: start=0, step=1, limit=4
    $region2: #{tpu_custom_call.1} parent=1 // loop_pre_header
      _
    $region3: #{tpu_custom_call.1} parent=1 // loop_header
      %s17 = sphi 0, %s21
      %p18 = scmp.ge.s32.totalorder %s17, 4
      %s24 = sphi 0, %s43
      %s25 = sphi 0, %s39
      %s26 = sphi 0, %s35
      %s27 = sphi 0, %s24
      %s28 = sphi 0, %s25
      %s29 = sphi 0, %s26
      %s30 = sphi 0, %s27
      %s31 = sphi 0, %s28
      %s32 = sphi 0, %s29
      %s50 = sphi 0, %s52
      %s53 = sphi 0, %s50
      %s54 = sphi 0, %s53
      %s70 = sphi 0, %s54
      %s74 = sphi 0, %s74
      %s76 = sphi 0, %s74
      %s77 = sphi 0, %s76
      %s91 = sphi 0, %s77
      %s95 = sphi 0, %s95
      %s97 = sphi 0, %s95
      %s98 = sphi 0, %s97
      %s112 = sphi 0, %s98
      %s116 = sphi 0, %s116
      %s118 = sphi 0, %s116
      %s119 = sphi 0, %s118
      %s133 = sphi 0, %s119
      %s141 = sphi 0, %s143
      %s144 = sphi 0, %s141
      %s145 = sphi 0, %s144
      %s161 = sphi 0, %s145
    $region4: #{tpu_custom_call.1} parent=1 // loop_header_branch
      %20 = sbr.rel (%p18) target = $region8
    $region5: #{tpu_custom_call.1} parent=1 // loop_body
      %s22 = ssub.s32 %s17, 1
      %s23 = ssub.s32 %s17, 2
      %s33 = sadd.s32 1, %s26
      %p34 = scmp.ge.s32.totalorder %s33, 1
      %s35 = scalar_select %p34, 0, %s33
      %s36 = sadd.s32 1, %s25
      %s37 = scalar_select %p34, %s36, %s25
      %p38 = scmp.ge.s32.totalorder %s37, 2
      %s39 = scalar_select %p38, 0, %s37
      %s40 = sadd.s32 1, %s24
      %s41 = scalar_select %p38, %s40, %s24
      %p42 = scmp.ge.s32.totalorder %s41, 1
      %s43 = scalar_select %p42, 0, %s41
      %s44 = sadd.s32 %s24, %s26
      %s45 = sadd.s32 %s43, %s35
      %s46 = ssub.s32 %s25, %s39
      %s47 = ssub.s32 %s44, %s45
      %s48 = sor.u32 %s46, %s47
      %p49 = scmp.eq.s32.totalorder %s48, 0
      %s51 = sadd.s32 %s50, 1
      %s52 = scalar_select %p49, %s50, %s51
      %p55 = pneg %p49
      %p56 = scmp.eq.s32.totalorder %s17, 1
      %p57 = por %p55, %p56
      %p58 = scmp.ne.s32.totalorder %s50, %s53
      %p59 = scmp.eq.s32.totalorder %s17, 0
      %p60 = por %p58, %p59
      %p61 = scmp.ne.s32.totalorder %s50, %s53
      %p62 = scmp.eq.s32.totalorder %s22, 1
      %p63 = por %p61, %p62
      %p64 = scmp.ne.s32.totalorder %s53, %s54
      %p65 = scmp.eq.s32.totalorder %s22, 0
      %p66 = por %p64, %p65
      %p67 = scmp.ne.s32.totalorder %s53, %s54
      %p68 = scmp.eq.s32.totalorder %s23, 1
      %p69 = por %p67, %p68
      %p71 = scmp.ne.s32.totalorder %s54, %s70
      %p72 = scmp.eq.s32.totalorder %s23, 0
      %p73 = por %p71, %p72
      %s75 = sadd.s32 %s74, 1
      %p78 = scmp.eq.s32.totalorder %s17, 1
      %p79 = scmp.ne.s32.totalorder %s74, %s76
      %p80 = scmp.eq.s32.totalorder %s17, 0
      %p81 = por %p79, %p80
      %p82 = scmp.ne.s32.totalorder %s74, %s76
      %p83 = scmp.eq.s32.totalorder %s22, 1
      %p84 = por %p82, %p83
      %p85 = scmp.ne.s32.totalorder %s76, %s77
      %p86 = scmp.eq.s32.totalorder %s22, 0
      %p87 = por %p85, %p86
      %p88 = scmp.ne.s32.totalorder %s76, %s77
      %p89 = scmp.eq.s32.totalorder %s23, 1
      %p90 = por %p88, %p89
      %p92 = scmp.ne.s32.totalorder %s77, %s91
      %p93 = scmp.eq.s32.totalorder %s23, 0
      %p94 = por %p92, %p93
      %s96 = sadd.s32 %s95, 1
      %p99 = scmp.eq.s32.totalorder %s17, 1
      %p100 = scmp.ne.s32.totalorder %s95, %s97
      %p101 = scmp.eq.s32.totalorder %s17, 0
      %p102 = por %p100, %p101
      %p103 = scmp.ne.s32.totalorder %s95, %s97
      %p104 = scmp.eq.s32.totalorder %s22, 1
      %p105 = por %p103, %p104
      %p106 = scmp.ne.s32.totalorder %s97, %s98
      %p107 = scmp.eq.s32.totalorder %s22, 0
      %p108 = por %p106, %p107
      %p109 = scmp.ne.s32.totalorder %s97, %s98
      %p110 = scmp.eq.s32.totalorder %s23, 1
      %p111 = por %p109, %p110
      %p113 = scmp.ne.s32.totalorder %s98, %s112
      %p114 = scmp.eq.s32.totalorder %s23, 0
      %p115 = por %p113, %p114
      %s117 = sadd.s32 %s116, 1
      %p120 = scmp.eq.s32.totalorder %s17, 1
      %p121 = scmp.ne.s32.totalorder %s116, %s118
      %p122 = scmp.eq.s32.totalorder %s17, 0
      %p123 = por %p121, %p122
      %p124 = scmp.ne.s32.totalorder %s116, %s118
      %p125 = scmp.eq.s32.totalorder %s22, 1
      %p126 = por %p124, %p125
      %p127 = scmp.ne.s32.totalorder %s118, %s119
      %p128 = scmp.eq.s32.totalorder %s22, 0
      %p129 = por %p127, %p128
      %p130 = scmp.ne.s32.totalorder %s118, %s119
      %p131 = scmp.eq.s32.totalorder %s23, 1
      %p132 = por %p130, %p131
      %p134 = scmp.ne.s32.totalorder %s119, %s133
      %p135 = scmp.eq.s32.totalorder %s23, 0
      %p136 = por %p134, %p135
      %s137 = ssub.s32 %s24, %s43
      %s138 = ssub.s32 %s25, %s39
      %s139 = sor.u32 %s137, %s138
      %p140 = scmp.eq.s32.totalorder %s139, 0
      %s142 = sadd.s32 %s141, 1
      %s143 = scalar_select %p140, %s141, %s142
      %p146 = pneg %p140
      %p147 = scmp.eq.s32.totalorder %s17, 1
      %p148 = por %p146, %p147
      %p149 = scmp.ne.s32.totalorder %s141, %s144
      %p150 = scmp.eq.s32.totalorder %s17, 0
      %p151 = por %p149, %p150
      %p152 = scmp.ne.s32.totalorder %s141, %s144
      %p153 = scmp.eq.s32.totalorder %s22, 1
      %p154 = por %p152, %p153
      %p155 = scmp.ne.s32.totalorder %s144, %s145
      %p156 = scmp.eq.s32.totalorder %s22, 0
      %p157 = por %p155, %p156
      %p158 = scmp.ne.s32.totalorder %s144, %s145
      %p159 = scmp.eq.s32.totalorder %s23, 1
      %p160 = por %p158, %p159
      %p162 = scmp.ne.s32.totalorder %s145, %s161
      %p163 = scmp.eq.s32.totalorder %s23, 0
      %p164 = por %p162, %p163
      %p165 = scmp.le.s32.totalorder 1, %s17
      %p166 = scmp.lt.s32.totalorder %s17, 3
      %p167 = pnand %p165, %p166
      %p168 = pneg %p167
      // Predicated region
      $region9: #{tpu_custom_call.1} parent=5 // pred_check
        _
      $region10: #{tpu_custom_call.1} parent=5 // pred_check_branch
        %170 = sbr.rel (%p167) target = $region12
      $region11: #{tpu_custom_call.1} parent=5 // pred_region
        %s171 = ssub.s32 %s17, 1
        // Predicated region
        $region13: #{tpu_custom_call.1} parent=11 // pred_check
          %p172 = pneg %p87
        $region14: #{tpu_custom_call.1} parent=11 // pred_check_branch
          %174 = sbr.rel (%p172) target = $region16
        $region15: #{tpu_custom_call.1} parent=11 // pred_region
          _
        $region16: #{tpu_custom_call.1} parent=11 // pred_fallthru
          _
        // Predicated region
        $region17: #{tpu_custom_call.1} parent=11 // pred_check
          %p175 = pneg %p108
        $region18: #{tpu_custom_call.1} parent=11 // pred_check_branch
          %177 = sbr.rel (%p175) target = $region20
        $region19: #{tpu_custom_call.1} parent=11 // pred_region
          _
        $region20: #{tpu_custom_call.1} parent=11 // pred_fallthru
          _
        // Predicated region
        $region21: #{tpu_custom_call.1} parent=11 // pred_check
          %p178 = pneg %p129
        $region22: #{tpu_custom_call.1} parent=11 // pred_check_branch
          %180 = sbr.rel (%p178) target = $region24
        $region23: #{tpu_custom_call.1} parent=11 // pred_region
          %182 = vsyncadd [#allocation6], 0
          %s183 = sshll.u32 %s3, 4
          %s184 = int_to_ptr.hbm [resolvable:$true] %s183
          %s185 = sshll.u32 [#allocation5], 4
          %s186 = int_to_ptr.vmem [resolvable:$true] %s185
          %191 = dma.hbm_to_vmem [thread:$0]  %s184, 4096, %s186, [#allocation6], 128, 128, 8
        $region24: #{tpu_custom_call.1} parent=11 // pred_fallthru
          _
      $region12: #{tpu_custom_call.1} parent=5 // pred_fallthru
        _
      %p192 = scmp.lt.s32.totalorder %s17, 2
      // Predicated region
      $region25: #{tpu_custom_call.1} parent=5 // pred_check
        %p193 = pneg %p192
      $region26: #{tpu_custom_call.1} parent=5 // pred_check_branch
        %195 = sbr.rel (%p193) target = $region28
      $region27: #{tpu_custom_call.1} parent=5 // pred_region
        // Predicated region
        $region29: #{tpu_custom_call.1} parent=27 // pred_check
          %p196 = pneg %p60
        $region30: #{tpu_custom_call.1} parent=27 // pred_check_branch
          %198 = sbr.rel (%p196) target = $region32
        $region31: #{tpu_custom_call.1} parent=27 // pred_region
          %s199 = sand.u32 %s50, 1
          %s200 = scalar_lea.sflag [#allocation3], %s199
          %s201 = sand.u32 %s50, 1
          %s202 = smul.addr %s201, 8
          %s203 = scalar_lea.vmem [#allocation2], %s202
          %s204 = sadd.s32 %s24, %s26
          %s205 = smul.u32 2, %s204
          %207 = vsyncadd %s200, 0
          %s208 = smul.addr %s25, 2
          %s209 = sadd.s32 %s205, %s208
          %s210 = smul.addr %s209, 4
          %s211 = scalar_lea.hbm %s0, %s210
          %s213 = sshll.u32 %s211, 4
          %s214 = int_to_ptr.hbm [resolvable:$true] %s213
          %s215 = sshll.u32 %s203, 4
          %s216 = int_to_ptr.vmem [resolvable:$true] %s215
          %218 = dma.hbm_to_vmem [thread:$0]  %s214, 128, %s216, %s200
        $region32: #{tpu_custom_call.1} parent=27 // pred_fallthru
          _
      $region28: #{tpu_custom_call.1} parent=5 // pred_fallthru
        _
      %p219 = scmp.le.s32.totalorder 1, %s17
      %p220 = scmp.lt.s32.totalorder %s17, 3
      %p221 = pnand %p219, %p220
      %p222 = pneg %p221
      // Predicated region
      $region33: #{tpu_custom_call.1} parent=5 // pred_check
        _
      $region34: #{tpu_custom_call.1} parent=5 // pred_check_branch
        %224 = sbr.rel (%p221) target = $region36
      $region35: #{tpu_custom_call.1} parent=5 // pred_region
        %s225 = ssub.s32 %s17, 1
        %s226 = sand.u32 %s53, 1
        %s227 = scalar_lea.sflag [#allocation3], %s226
        %s228 = sand.u32 %s53, 1
        %s229 = smul.addr %s228, 8
        %s230 = scalar_lea.vmem [#allocation2], %s229
        // Predicated region
        $region37: #{tpu_custom_call.1} parent=35 // pred_check
          %p231 = pneg %p66
        $region38: #{tpu_custom_call.1} parent=35 // pred_check_branch
          %233 = sbr.rel (%p231) target = $region40
        $region39: #{tpu_custom_call.1} parent=35 // pred_region
          %235 = dma.done %s227, 128
        $region40: #{tpu_custom_call.1} parent=35 // pred_fallthru
          _
        // Predicated region
        $region41: #{tpu_custom_call.1} parent=35 // pred_check
          %p236 = pneg %p129
        $region42: #{tpu_custom_call.1} parent=35 // pred_check_branch
          %238 = sbr.rel (%p236) target = $region44
        $region43: #{tpu_custom_call.1} parent=35 // pred_region
          %240 = dma.done [#allocation6], 4096
        $region44: #{tpu_custom_call.1} parent=35 // pred_fallthru
          _
        %s241 = sand.u32 %s53, 1
        %s242 = scalar_lea.sflag [#allocation3], %s241
        %s243 = sand.u32 %s53, 1
        %s244 = smul.addr %s243, 8
        %s245 = scalar_lea.vmem [#allocation2], %s244
        %p246 = pneg %p66
        %p247 = pneg %p63
        %p248 = pneg %p87
        %p249 = pneg %p84
        %p250 = pneg %p108
        %p251 = pneg %p105
        %p252 = pneg %p129
        %p253 = pneg %p126
        %p254 = pneg %p157
        %p255 = pneg %p154
        %s256 = sand.u32 %s144, 1
        %s257 = scalar_lea.sflag [#allocation4], %s256
        %s258 = sand.u32 %s144, 1
        %s259 = smul.addr %s258, 4
        %s260 = scalar_lea.vmem [#allocation7], %s259
        %s261 = sadd.s32 %s27, %s29
        %s262 = smul.u32 2, %s261
        %p263 = scmp.eq.s32.totalorder %s29, 0
        // Predicated region
        $region45: #{tpu_custom_call.1} parent=35 // pred_check
          %p264 = pneg %p263
        $region46: #{tpu_custom_call.1} parent=35 // pred_check_branch
          %266 = sbr.rel (%p264) target = $region48
        $region47: #{tpu_custom_call.1} parent=35 // pred_region
          %267 = vst [vmem:[%s260] sm:$0xf] 0.0
        $region48: #{tpu_custom_call.1} parent=35 // pred_fallthru
          _
        %v268 = vld [vmem:[%s1] sm:$0xf]
        %v269 = vld [vmem:[%s230] sm:$0xff]
        %v270 = vld [vmem:[%s2] sm:$0xf]
        %272 = vset.pattern.permute.xlu0 0
        %273 = vperm.xlu0 %272, %v270
        %v274 = vpop.permute.xlu0 %273
        %277 = vst [vmem:[#allocation1] ss:$2 sm:$0xff] %v269
        %v278 = vld.sshfl [vmem:[#allocation1] sm:$0xff pattern:$0x75316420]
        %v279 = vld.sshfl [vmem:[#allocation1 + $0x8] sm:$0xff pattern:$0x75316420]
        %vm280 = vcmask 31744
        %v282 = vsel %vm280, %v268, 0
        %vm284 = vcmask 1043456
        %v285 = vsel %vm284, %v278, 0
        %v287 = vsel %vm284, %v279, 0
        %289 = vmatpush.msra.mxu0 0.0
        %290 = vmatpush.msra.mxu0 0.0
        %291 = vmatpush.msra.mxu0 0.0
        %292 = vmatpush.msra.mxu0 0.0
        %293 = vmatpush.msra.mxu0 0.0
        %294 = vmatpush.msra.mxu0 0.0
        %295 = vmatpush.msra.mxu0 0.0
        %296 = vmatpush.msra.mxu0 0.0
        %297 = vmatpush.msra.mxu0 0.0
        %298 = vmatpush.msra.mxu0 0.0
        %299 = vmatpush.msra.mxu0 0.0
        %300 = vmatpush.msra.mxu0 0.0
        %301 = vmatpush.msra.mxu0 0.0
        %302 = vmatpush.msra.mxu0 0.0
        %303 = vmatpush.msra.mxu0 0.0
        %304 = vmatpush.msra.mxu0 %v285
        %305 = vmatmul.f32.gmra.mxu0 %v282
        %v306 = vpop.f32.mrf.mxu0
        %v307 = vadd.f32 %v274, %v306
        %308 = vdwg.mxu0
        %309 = vmatpush.msra.mxu0 0.0
        %310 = vmatpush.msra.mxu0 0.0
        %311 = vmatpush.msra.mxu0 0.0
        %312 = vmatpush.msra.mxu0 0.0
        %313 = vmatpush.msra.mxu0 0.0
        %314 = vmatpush.msra.mxu0 0.0
        %315 = vmatpush.msra.mxu0 0.0
        %316 = vmatpush.msra.mxu0 0.0
        %317 = vmatpush.msra.mxu0 0.0
        %318 = vmatpush.msra.mxu0 0.0
        %319 = vmatpush.msra.mxu0 0.0
        %320 = vmatpush.msra.mxu0 0.0
        %321 = vmatpush.msra.mxu0 0.0
        %322 = vmatpush.msra.mxu0 0.0
        %323 = vmatpush.msra.mxu0 0.0
        %324 = vmatpush.msra.mxu0 %v287
        %325 = vmatmul.f32.gmra.mxu0 %v282
        %v326 = vpop.f32.mrf.mxu0
        %v327 = vadd.f32 %v274, %v326
        %328 = vdwg.mxu0
        %v329 = vmax.f32 %v307, 0.0
        %v330 = vmax.f32 %v327, 0.0
        %s331 = sadd.s32 %s27, %s29
        %s332 = smul.u32 %s331, 256
        %s333 = scalar_lea.vmem [#allocation5], %s332
        %v334 = vld [vmem:[%s333] sm:$0xff]
        %v335 = vld [vmem:[%s333 + $0x8] sm:$0xff]
        %v336 = vld [vmem:[%s333 + $0x10] sm:$0xff]
        %v337 = vld [vmem:[%s333 + $0x18] sm:$0xff]
        %v338 = vld [vmem:[%s333 + $0x20] sm:$0xff]
        %v339 = vld [vmem:[%s333 + $0x28] sm:$0xff]
        %v340 = vld [vmem:[%s333 + $0x30] sm:$0xff]
        %v341 = vld [vmem:[%s333 + $0x38] sm:$0xff]
        %v342 = vld [vmem:[%s333 + $0x40] sm:$0xff]
        %v343 = vld [vmem:[%s333 + $0x48] sm:$0xff]
        %v344 = vld [vmem:[%s333 + $0x50] sm:$0xff]
        %v345 = vld [vmem:[%s333 + $0x58] sm:$0xff]
        %v346 = vld [vmem:[%s333 + $0x60] sm:$0xff]
        %v347 = vld [vmem:[%s333 + $0x68] sm:$0xff]
        %v348 = vld [vmem:[%s333 + $0x70] sm:$0xff]
        %v349 = vld [vmem:[%s333 + $0x78] sm:$0xff]
        %v350 = vld [vmem:[%s333 + $0x80] sm:$0xff]
        %v351 = vld [vmem:[%s333 + $0x88] sm:$0xff]
        %v352 = vld [vmem:[%s333 + $0x90] sm:$0xff]
        %v353 = vld [vmem:[%s333 + $0x98] sm:$0xff]
        %v354 = vld [vmem:[%s333 + $0xa0] sm:$0xff]
        %v355 = vld [vmem:[%s333 + $0xa8] sm:$0xff]
        %v356 = vld [vmem:[%s333 + $0xb0] sm:$0xff]
        %v357 = vld [vmem:[%s333 + $0xb8] sm:$0xff]
        %v358 = vld [vmem:[%s333 + $0xc0] sm:$0xff]
        %v359 = vld [vmem:[%s333 + $0xc8] sm:$0xff]
        %v360 = vld [vmem:[%s333 + $0xd0] sm:$0xff]
        %v361 = vld [vmem:[%s333 + $0xd8] sm:$0xff]
        %v362 = vld [vmem:[%s333 + $0xe0] sm:$0xff]
        %v363 = vld [vmem:[%s333 + $0xe8] sm:$0xff]
        %v364 = vld [vmem:[%s333 + $0xf0] sm:$0xff]
        %v365 = vld [vmem:[%s333 + $0xf8] sm:$0xff]
        %v366 = vld [vmem:[%s260] sm:$0xf]
        %367 = vmatpush.msra.mxu0 %v349
        %368 = vmatpush.msra.mxu0 %v348
        %369 = vmatpush.msra.mxu0 %v347
        %370 = vmatpush.msra.mxu0 %v346
        %371 = vmatpush.msra.mxu0 %v345
        %372 = vmatpush.msra.mxu0 %v344
        %373 = vmatpush.msra.mxu0 %v343
        %374 = vmatpush.msra.mxu0 %v342
        %375 = vmatpush.msra.mxu0 %v341
        %376 = vmatpush.msra.mxu0 %v340
        %377 = vmatpush.msra.mxu0 %v339
        %378 = vmatpush.msra.mxu0 %v338
        %379 = vmatpush.msra.mxu0 %v337
        %380 = vmatpush.msra.mxu0 %v336
        %381 = vmatpush.msra.mxu0 %v335
        %382 = vmatpush.msra.mxu0 %v334
        %383 = vmatmul.f32.gmra.mxu0 %v329
        %v384 = vpop.f32.mrf.mxu0
        %v385 = vadd.f32 0.0, %v384
        %386 = vdwg.mxu0
        %387 = vmatpush.msra.mxu0 %v365
        %388 = vmatpush.msra.mxu0 %v364
        %389 = vmatpush.msra.mxu0 %v363
        %390 = vmatpush.msra.mxu0 %v362
        %391 = vmatpush.msra.mxu0 %v361
        %392 = vmatpush.msra.mxu0 %v360
        %393 = vmatpush.msra.mxu0 %v359
        %394 = vmatpush.msra.mxu0 %v358
        %395 = vmatpush.msra.mxu0 %v357
        %396 = vmatpush.msra.mxu0 %v356
        %397 = vmatpush.msra.mxu0 %v355
        %398 = vmatpush.msra.mxu0 %v354
        %399 = vmatpush.msra.mxu0 %v353
        %400 = vmatpush.msra.mxu0 %v352
        %401 = vmatpush.msra.mxu0 %v351
        %402 = vmatpush.msra.mxu0 %v350
        %403 = vmatmul.f32.gmra.mxu0 %v330
        %v404 = vpop.f32.mrf.mxu0
        %v405 = vadd.f32 %v385, %v404
        %406 = vdwg.mxu0
        %v407 = vadd.f32 %v366, %v405
        %408 = vst [vmem:[%s260] sm:$0xf] %v407
        %s409 = sand.u32 %s144, 1
        %s410 = scalar_lea.sflag [#allocation4], %s409
        %s411 = sand.u32 %s144, 1
        %s412 = smul.addr %s411, 4
        %s413 = scalar_lea.vmem [#allocation7], %s412
        // Predicated region
        $region49: #{tpu_custom_call.1} parent=35 // pred_check
          %p414 = pneg %p154
        $region50: #{tpu_custom_call.1} parent=35 // pred_check_branch
          %416 = sbr.rel (%p414) target = $region52
        $region51: #{tpu_custom_call.1} parent=35 // pred_region
          %418 = vsyncadd %s410, 0
          %s419 = smul.addr %s27, 2
          %s420 = sadd.s32 %s28, %s419
          %s421 = smul.addr %s420, 4
          %s422 = scalar_lea.hbm %s4, %s421
          %s424 = sshll.u32 %s413, 4
          %s425 = int_to_ptr.vmem [resolvable:$true] %s424
          %s426 = sshll.u32 %s422, 4
          %s427 = int_to_ptr.hbm [resolvable:$true] %s426
          %429 = dma.vmem_to_hbm [thread:$0]  %s425, 64, %s427, %s410
        $region52: #{tpu_custom_call.1} parent=35 // pred_fallthru
          _
      $region36: #{tpu_custom_call.1} parent=5 // pred_fallthru
        _
      %p430 = scmp.le.s32.totalorder 2, %s17
      // Predicated region
      $region53: #{tpu_custom_call.1} parent=5 // pred_check
        %p431 = pneg %p430
      $region54: #{tpu_custom_call.1} parent=5 // pred_check_branch
        %433 = sbr.rel (%p431) target = $region56
      $region55: #{tpu_custom_call.1} parent=5 // pred_region
        %s434 = ssub.s32 %s17, 2
        // Predicated region
        $region57: #{tpu_custom_call.1} parent=55 // pred_check
          %p435 = pneg %p160
        $region58: #{tpu_custom_call.1} parent=55 // pred_check_branch
          %437 = sbr.rel (%p435) target = $region60
        $region59: #{tpu_custom_call.1} parent=55 // pred_region
          %s438 = sand.u32 %s145, 1
          %s439 = scalar_lea.sflag [#allocation4], %s438
          %s440 = sand.u32 %s145, 1
          %s441 = smul.addr %s440, 4
          %s442 = scalar_lea.vmem [#allocation7], %s441
          %444 = dma.done %s439, 64
        $region60: #{tpu_custom_call.1} parent=55 // pred_fallthru
          _
      $region56: #{tpu_custom_call.1} parent=5 // pred_fallthru
        _
    $region6: #{tpu_custom_call.1} parent=1 // loop_footer
      %s21 = sadd.s32 1, %s17
    $region7: #{tpu_custom_call.1} parent=1 // loop_footer_branch
      %16 = sbr.rel target = $region3
    $region8: #{tpu_custom_call.1} parent=1 // loop_exit
      _
    %445 = vsyncpa [#allocation3], 1
    %s446 = scalar_lea.sflag [#allocation3], 1
    %447 = vsyncpa %s446, 1
    %448 = vsyncpa [#allocation6], 1
    %449 = vsyncpa [#allocation4], 1
    %s450 = scalar_lea.sflag [#allocation4], 1
    %451 = vsyncpa %s450, 1

</llo_original>
